<compile_context>
chip_gen: v5e
topology: v5e:2x2
jax: 0.10.0
libtpu: 0.0.40
codegen_flags: <defaults>
</compile_context>

<pallas_src>
import functools
import math

import jax
import jax.numpy as jnp
from jax import lax
from jax.experimental import pallas as pl
from jax.experimental.pallas import tpu as pltpu

_VMEM_LIMIT = 48 * 1024 * 1024


# ---------------------------------------------------------------------------
# Linear kernel: y = x @ W + b   (used for fused QKV projection and out-proj)
# ---------------------------------------------------------------------------
def _linear_kernel(x_ref, w_ref, b_ref, o_ref):
    y = jnp.dot(x_ref[...], w_ref[...], preferred_element_type=jnp.float32)
    y = y + b_ref[...]                               # bias kept in f32
    o_ref[...] = y.astype(o_ref.dtype)


def _linear(x2d, w, b, *, out_dtype, row_tile=512):
    m, c_in = x2d.shape
    c_out = w.shape[1]
    tm = min(row_tile, m)
    return pl.pallas_call(
        _linear_kernel,
        out_shape=jax.ShapeDtypeStruct((m, c_out), out_dtype),
        grid=(pl.cdiv(m, tm),),
        in_specs=[
            pl.BlockSpec((tm, c_in), lambda i: (i, 0)),
            pl.BlockSpec((c_in, c_out), lambda i: (0, 0)),
            pl.BlockSpec((1, c_out), lambda i: (0, 0)),
        ],
        out_specs=pl.BlockSpec((tm, c_out), lambda i: (i, 0)),
        compiler_params=pltpu.CompilerParams(
            dimension_semantics=("parallel",),
            vmem_limit_bytes=_VMEM_LIMIT,
        ),
    )(x2d, w, b)


# ---------------------------------------------------------------------------
# Causal attention kernel: one (batch, head, q-tile) per grid step.
# ---------------------------------------------------------------------------
def _attention_kernel(q_ref, k_ref, v_ref, o_ref, att_ref, *,
                      q_tile, compute_dtype, approx_recip):
    qi = pl.program_id(2)

    q = q_ref[0, 0]                                  # (TQ, hd)
    k = k_ref[0, 0]                                  # (T , hd)
    v = v_ref[0, 0]                                  # (T , hd)
    hd = q.shape[-1]

    # Fold 1/sqrt(hd) into q: T*hd multiplies instead of T*T.
    q = q * (1.0 / math.sqrt(hd))

    # scores = q @ k^T, contracting head_dim (no explicit transpose materialized).
    s = lax.dot_general(q, k, (((1,), (1,)), ((), ())),
                        preferred_element_type=jnp.float32)       # (TQ, T) f32

    # Causal mask with a large finite negative (NaN-safe if the q tile is padded).
    row = lax.broadcasted_iota(jnp.int32, s.shape, 0) + qi * q_tile
    col = lax.broadcasted_iota(jnp.int32, s.shape, 1)
    s = jnp.where(col <= row, s, jnp.float32(-1e30))

    # Manual softmax: exp + reciprocal run on the EUP slot, multiplies on the VPU.
    m = jnp.max(s, axis=-1, keepdims=True)
    e = jnp.exp(s - m)
    denom = jnp.sum(e, axis=-1, keepdims=True)
    p = e * pl.reciprocal(denom, approx=approx_recip)             # (TQ, T) f32

    # Single contiguous, lane-dense store of the probs for this (b, h, q-tile).
    att_ref[0, 0] = p.astype(att_ref.dtype)

    # attn_drop == identity (inference).  TODO(synk): stochastic dropout not implemented.
    o = jnp.dot(p.astype(compute_dtype), v, preferred_element_type=jnp.float32)
    o_ref[0, 0] = o.astype(o_ref.dtype)


def _attention(q, k, v, *, q_tile, compute_dtype, attn_dtype, approx_recip):
    B, H, T, hd = q.shape
    tq = min(q_tile, T)
    kernel = functools.partial(_attention_kernel, q_tile=tq,
                               compute_dtype=compute_dtype,
                               approx_recip=approx_recip)
    return pl.pallas_call(
        kernel,
        out_shape=(
            jax.ShapeDtypeStruct((B, H, T, hd), compute_dtype),
            jax.ShapeDtypeStruct((B, H, T, T), attn_dtype),
        ),
        grid=(B, H, pl.cdiv(T, tq)),
        in_specs=[
            pl.BlockSpec((1, 1, tq, hd), lambda b, h, i: (b, h, i, 0)),
            pl.BlockSpec((1, 1, T, hd), lambda b, h, i: (b, h, 0, 0)),
            pl.BlockSpec((1, 1, T, hd), lambda b, h, i: (b, h, 0, 0)),
        ],
        out_specs=(
            pl.BlockSpec((1, 1, tq, hd), lambda b, h, i: (b, h, i, 0)),
            pl.BlockSpec((1, 1, tq, T), lambda b, h, i: (b, h, i, 0)),
        ),
        compiler_params=pltpu.CompilerParams(
            dimension_semantics=("parallel", "parallel", "arbitrary"),
            vmem_limit_bytes=_VMEM_LIMIT,
        ),
    )(q, k, v)


# ---------------------------------------------------------------------------
# Full module forward.
# ---------------------------------------------------------------------------
def causal_self_attention(x, params, n_head, *,
                          compute_dtype=jnp.float32,
                          attn_dtype=jnp.float32,
                          q_tile=128, row_tile=512):
    """Returns (y, attn_save) exactly like the PyTorch module (dropout = identity).

    Linear weights are stored as (C_in, C_out), i.e. W == torch_linear.weight.T.
    """
    wq, bq, wk, bk, wv, bv, wp, bp = params
    B, T, C = x.shape
    hd = C // n_head
    approx_recip = jnp.dtype(compute_dtype) != jnp.dtype(jnp.float32)

    # Fused QKV projection: one (C, 3C) matmul.
    w_qkv = jnp.concatenate([wq, wk, wv], axis=1).astype(compute_dtype)
    b_qkv = jnp.concatenate([bq, bk, bv]).reshape(1, 3 * C).astype(jnp.float32)
    qkv = _linear(x.reshape(B * T, C).astype(compute_dtype), w_qkv, b_qkv,
                  out_dtype=compute_dtype, row_tile=row_tile)      # (B*T, 3C)

    # Head split: pure layout plumbing at the XLA level (same as .view().transpose()).
    qkv = qkv.reshape(B, T, 3, n_head, hd)
    q = jnp.transpose(qkv[:, :, 0], (0, 2, 1, 3))                  # (B, H, T, hd)
    k = jnp.transpose(qkv[:, :, 1], (0, 2, 1, 3))
    v = jnp.transpose(qkv[:, :, 2], (0, 2, 1, 3))

    y_heads, att = _attention(q, k, v, q_tile=q_tile,
                              compute_dtype=compute_dtype,
                              attn_dtype=attn_dtype,
                              approx_recip=approx_recip)

    # Merge heads (layout) + output projection.  resid_drop == identity.
    y2d = jnp.transpose(y_heads, (0, 2, 1, 3)).reshape(B * T, C)
    y = _linear(y2d, wp.astype(compute_dtype),
                bp.reshape(1, C).astype(jnp.float32),
                out_dtype=x.dtype, row_tile=row_tile)
    return y.reshape(B, T, C), att


# ---------------------------------------------------------------------------
# Plain-JAX reference mirroring the PyTorch forward (dropout = identity).
# ---------------------------------------------------------------------------
def _reference(x, params, n_head):
    wq, bq, wk, bk, wv, bv, wp, bp = params
    B, T, C = x.shape
    hd = C // n_head

    def split_heads(t):
        return t.reshape(B, T, n_head, hd).transpose(0, 2, 1, 3)

    q = split_heads(x @ wq + bq)
    k = split_heads(x @ wk + bk)
    v = split_heads(x @ wv + bv)
    att = jnp.einsum('bhtd,bhsd->bhts', q, k) / math.sqrt(hd)
    mask = jnp.tril(jnp.ones((T, T), bool))
    att = jnp.where(mask[None, None], att, -jnp.inf)
    att = jax.nn.softmax(att, axis=-1)
    y = jnp.einsum('bhts,bhsd->bhtd', att, v)
    y = y.transpose(0, 2, 1, 3).reshape(B, T, C)
    y = y @ wp + bp
    return y, att


if __name__ == "__main__":
    # Small config consistent with the module: B=2, T=8 (block_size+num), C=32, n_head=4
    B, T, C, n_head = 2, 8, 32, 4

    key = jax.random.PRNGKey(0)
    keys = jax.random.split(key, 9)
    x = jax.random.normal(keys[0], (B, T, C), dtype=jnp.float32)

    def lin(kw, kb):
        w = 0.1 * jax.random.normal(kw, (C, C), dtype=jnp.float32)
        b = 0.05 * jax.random.normal(kb, (C,), dtype=jnp.float32)
        return w, b

    wq, bq = lin(keys[1], keys[2])
    wk, bk = lin(keys[3], keys[4])
    wv, bv = lin(keys[5], keys[6])
    wp, bp = lin(keys[7], keys[8])
    params = (wq, bq, wk, bk, wv, bv, wp, bp)

    # f32 path: tight check against the reference.
    y, att = causal_self_attention(x, params, n_head)
    jax.block_until_ready((y, att))

    y_ref, att_ref = _reference(x, params, n_head)
    assert jnp.allclose(y, y_ref, atol=1e-4, rtol=1e-4), "output mismatch (f32)"
    assert jnp.allclose(att, att_ref, atol=1e-5, rtol=1e-4), "attention-prob mismatch (f32)"

    # bf16 MXU path (f32 accumulation): loose smoke check.
    y_b, att_b = causal_self_attention(x, params, n_head,
                                       compute_dtype=jnp.bfloat16,
                                       attn_dtype=jnp.bfloat16)
    jax.block_until_ready((y_b, att_b))
    assert jnp.allclose(y_b.astype(jnp.float32), y_ref, atol=1e-1, rtol=1e-1), \
        "output mismatch (bf16)"
    assert jnp.allclose(att_b.astype(jnp.float32), att_ref, atol=5e-2), \
        "attention-prob mismatch (bf16)"

    print("KERNEL_OK")
</pallas_src>

<mosaic_0001>
module attributes {stable_mosaic.version = 11 : i64} {
  func.func @_linear_kernel(%arg0: i32, %arg1: memref<16x32xf32, #tpu.memory_space<vmem>>, %arg2: memref<32x96xf32, #tpu.memory_space<vmem>>, %arg3: memref<1x96xf32, #tpu.memory_space<vmem>>, %arg4: memref<16x96xf32, #tpu.memory_space<vmem>>) attributes {dimension_semantics = [#tpu.dimension_semantics<parallel>], iteration_bounds = array<i64: 1>, scalar_prefetch = 0 : i64, scratch_operands = 0 : i64, tpu.core_type = #tpu.core_type<tc>, window_params = [{transform_indices = @transform_0, window_bounds = array<i64: 16, 32>}, {pipeline_mode = #tpu.pipeline_mode<synchronous>, transform_indices = @transform_1, window_bounds = array<i64: 32, 96>}, {pipeline_mode = #tpu.pipeline_mode<synchronous>, transform_indices = @transform_2, window_bounds = array<i64: 1, 96>}, {transform_indices = @transform_3, window_bounds = array<i64: 16, 96>}]} {
    %c0 = arith.constant 0 : index
    %c0_0 = arith.constant 0 : index
    %0 = vector.load %arg1[%c0, %c0_0] : memref<16x32xf32, #tpu.memory_space<vmem>>, vector<16x32xf32>
    %c0_1 = arith.constant 0 : index
    %c0_2 = arith.constant 0 : index
    %1 = vector.load %arg2[%c0_1, %c0_2] : memref<32x96xf32, #tpu.memory_space<vmem>>, vector<32x96xf32>
    %cst = arith.constant dense<0.000000e+00> : vector<16x96xf32>
    %2 = tpu.matmul %0, %1, %cst {dimension_numbers = #tpu.dot_dimension_numbers<[1], [0], [0], [1], [0, 0, 1, 1], [], []>} : vector<16x32xf32>, vector<32x96xf32>, vector<16x96xf32> -> vector<16x96xf32>
    %c0_3 = arith.constant 0 : index
    %c0_4 = arith.constant 0 : index
    %3 = vector.load %arg3[%c0_3, %c0_4] : memref<1x96xf32, #tpu.memory_space<vmem>>, vector<1x96xf32>
    %4 = vector.broadcast %3 : vector<1x96xf32> to vector<16x96xf32>
    %5 = arith.addf %2, %4 : vector<16x96xf32>
    %c0_5 = arith.constant 0 : index
    %c0_6 = arith.constant 0 : index
    %6 = vector.load %arg4[%c0_5, %c0_6] : memref<16x96xf32, #tpu.memory_space<vmem>>, vector<16x96xf32>
    tpu.vector_store %arg4[%c0_5, %c0_6], %5 {strides = array<i32>} : memref<16x96xf32, #tpu.memory_space<vmem>>, vector<16x96xf32>,
    return
  }
  func.func @transform_0(%arg0: i32) -> (i32, i32) {
    %c0_i32 = arith.constant 0 : i32
    %c0_i32_0 = arith.constant 0 : i32
    return %arg0, %c0_i32 : i32, i32
  }
  func.func @transform_1(%arg0: i32) -> (i32, i32) {
    %c0_i32 = arith.constant 0 : i32
    %c0_i32_0 = arith.constant 0 : i32
    %c0_i32_1 = arith.constant 0 : i32
    return %c0_i32, %c0_i32_0 : i32, i32
  }
  func.func @transform_2(%arg0: i32) -> (i32, i32) {
    %c0_i32 = arith.constant 0 : i32
    %c0_i32_0 = arith.constant 0 : i32
    %c0_i32_1 = arith.constant 0 : i32
    return %c0_i32, %c0_i32_0 : i32, i32
  }
  func.func @transform_3(%arg0: i32) -> (i32, i32) {
    %c0_i32 = arith.constant 0 : i32
    %c0_i32_0 = arith.constant 0 : i32
    return %arg0, %c0_i32 : i32, i32
  }
}

</mosaic_0001>

<llo_original>
// kernel: tpu_custom_call.1
$region0: #{tpu_custom_call.1}
  #allocation0 [shape = 'u32[]', space=smem, size = 0x4, offset = 0x4, fixed_abs, tag = 'smem constant byte address 0x4 - core index']
  #allocation1 [shape = 'u32[72,128]{1,0:T(1,128)}', space=vmem, size = 0x9000, scoped, tag = 'internal scratch']
  %s0 = inlined_call_operand.hbm [shape: f32[16,32], index: 0, kind: input, shape index: {}]
  %s1 = inlined_call_operand.hbm [shape: f32[32,96], index: 1, kind: input, shape index: {}]
  %s2 = inlined_call_operand.vmem [shape: f32[1,96], index: 2, kind: input, shape index: {}]
  %s3 = inlined_call_operand.hbm [shape: f32[16,96], index: 3, kind: output, shape index: {}]
  %s4 = sld [smem:[#allocation0]]
  $region30: #{tpu_custom_call.1} parent=0
    _
  %s6 = ssub.s32 1, %s4
  %s7 = scalar_select 0, %s6, %s4
  $region1: #{tpu_custom_call.1} parent=0
    #allocation2 [shape = 'u8[8192]{0}', space=vmem, size = 0x2000, scoped, tag = 'input window, operand 0, single buffered']
    #allocation3 [shape = 's32[1]{0}', space=sflag, size = 0x4, scoped, tag = 'scoped memory for tpu_custom_call.1']
    #allocation4 [shape = 's32[1]{0}', space=sflag, size = 0x4, scoped, tag = 'scoped memory for tpu_custom_call.1']
    #allocation5 [shape = 'u8[16384]{0}', space=vmem, size = 0x4000, scoped, tag = 'input window, operand 1, single buffered']
    #allocation6 [shape = 's32[1]{0}', space=sflag, size = 0x4, scoped, tag = 'scoped memory for tpu_custom_call.1']
    #allocation7 [shape = 'u8[8192]{0}', space=vmem, size = 0x2000, scoped, tag = 'output window, operand 0, single buffered']
    %8 = vsyncpa [#allocation3], 0
    %9 = vsyncpa [#allocation6], 0
    %10 = vsyncpa [#allocation4], 0
    // Predicated region
    $region2: #{tpu_custom_call.1} parent=1 // pred_check
      _
    $region3: #{tpu_custom_call.1} parent=1 // pred_check_branch
      %12 = sbr.rel (0) target = $region5
    $region4: #{tpu_custom_call.1} parent=1 // pred_region
      %14 = vsyncadd [#allocation3], 0
      %s15 = sshll.u32 %s0, 4
      %s16 = int_to_ptr.hbm [resolvable:$true] %s15
      %s17 = sshll.u32 [#allocation2], 4
      %s18 = int_to_ptr.vmem [resolvable:$true] %s17
      %23 = dma.hbm_to_vmem [thread:$0]  %s16, 256, %s18, [#allocation3], 128, 128, 8
    $region5: #{tpu_custom_call.1} parent=1 // pred_fallthru
      _
    // Predicated region
    $region6: #{tpu_custom_call.1} parent=1 // pred_check
      _
    $region7: #{tpu_custom_call.1} parent=1 // pred_check_branch
      %25 = sbr.rel (0) target = $region9
    $region8: #{tpu_custom_call.1} parent=1 // pred_region
      %27 = vsyncadd [#allocation6], 0
      %s28 = sshll.u32 %s1, 4
      %s29 = int_to_ptr.hbm [resolvable:$true] %s28
      %s30 = sshll.u32 [#allocation5], 4
      %s31 = int_to_ptr.vmem [resolvable:$true] %s30
      %36 = dma.hbm_to_vmem [thread:$0]  %s29, 512, %s31, [#allocation6], 128, 128, 8
    $region9: #{tpu_custom_call.1} parent=1 // pred_fallthru
      _
    // Predicated region
    $region10: #{tpu_custom_call.1} parent=1 // pred_check
      _
    $region11: #{tpu_custom_call.1} parent=1 // pred_check_branch
      %38 = sbr.rel (0) target = $region13
    $region12: #{tpu_custom_call.1} parent=1 // pred_region
      _
    $region13: #{tpu_custom_call.1} parent=1 // pred_fallthru
      _
    // Predicated region
    $region14: #{tpu_custom_call.1} parent=1 // pred_check
      _
    $region15: #{tpu_custom_call.1} parent=1 // pred_check_branch
      %40 = sbr.rel (0) target = $region17
    $region16: #{tpu_custom_call.1} parent=1 // pred_region
      %42 = dma.done [#allocation3], 256
    $region17: #{tpu_custom_call.1} parent=1 // pred_fallthru
      _
    // Predicated region
    $region18: #{tpu_custom_call.1} parent=1 // pred_check
      _
    $region19: #{tpu_custom_call.1} parent=1 // pred_check_branch
      %44 = sbr.rel (0) target = $region21
    $region20: #{tpu_custom_call.1} parent=1 // pred_region
      %46 = dma.done [#allocation6], 512
    $region21: #{tpu_custom_call.1} parent=1 // pred_fallthru
      _
    %v47 = vld [vmem:[#allocation2] sm:$0xff]
    %v48 = vld [vmem:[#allocation2 + $0x8] sm:$0xff]
    %v49 = vld [vmem:[#allocation5] sm:$0xff]
    %v50 = vld [vmem:[#allocation5 + $0x8] sm:$0xff]
    %v51 = vld [vmem:[#allocation5 + $0x10] sm:$0xff]
    %v52 = vld [vmem:[#allocation5 + $0x18] sm:$0xff]
    %v53 = vld [vmem:[%s2] sm:$0x1]
    %v55 = vperm.slane %v53, 0
    %vm57 = vcmask 261120
    %v59 = vsel %vm57, %v47, 0
    %v62 = vsel %vm57, %v48, 0
    %64 = vmatpush.msra.mxu0 0.0
    %65 = vmatpush.msra.mxu0 0.0
    %66 = vmatpush.msra.mxu0 0.0
    %67 = vmatpush.msra.mxu0 0.0
    %68 = vmatpush.msra.mxu0 0.0
    %69 = vmatpush.msra.mxu0 0.0
    %70 = vmatpush.msra.mxu0 0.0
    %71 = vmatpush.msra.mxu0 0.0
    %72 = vmatpush.msra.mxu0 0.0
    %73 = vmatpush.msra.mxu0 0.0
    %74 = vmatpush.msra.mxu0 0.0
    %75 = vmatpush.msra.mxu0 0.0
    %76 = vmatpush.msra.mxu0 %v52
    %77 = vmatpush.msra.mxu0 %v51
    %78 = vmatpush.msra.mxu0 %v50
    %79 = vmatpush.msra.mxu0 %v49
    %80 = vmatmul.f32.gmra.mxu0 %v59
    %v81 = vpop.f32.mrf.mxu0
    %v82 = vadd.f32 %v55, %v81
    %83 = vmatmul.f32.gmra.mxu0 %v62
    %v84 = vpop.f32.mrf.mxu0
    %v85 = vadd.f32 %v55, %v84
    %86 = vdwg.mxu0
    %vm87 = vcmask 785408
    %88 = vst.msk [vmem:[#allocation7] sm:$0xff] %vm87, %v82
    %89 = vst.msk [vmem:[#allocation7 + $0x8] sm:$0xff] %vm87, %v85
    // Predicated region
    $region22: #{tpu_custom_call.1} parent=1 // pred_check
      _
    $region23: #{tpu_custom_call.1} parent=1 // pred_check_branch
      %91 = sbr.rel (0) target = $region25
    $region24: #{tpu_custom_call.1} parent=1 // pred_region
      %93 = vsyncadd [#allocation4], 0
      %s94 = sshll.u32 [#allocation7], 4
      %s95 = int_to_ptr.vmem [resolvable:$true] %s94
      %s96 = sshll.u32 %s3, 4
      %s97 = int_to_ptr.hbm [resolvable:$true] %s96
      %102 = dma.vmem_to_hbm [thread:$0]  %s95, 256, %s97, [#allocation4], 128, 128, 8
    $region25: #{tpu_custom_call.1} parent=1 // pred_fallthru
      _
    // Predicated region
    $region26: #{tpu_custom_call.1} parent=1 // pred_check
      _
    $region27: #{tpu_custom_call.1} parent=1 // pred_check_branch
      %104 = sbr.rel (0) target = $region29
    $region28: #{tpu_custom_call.1} parent=1 // pred_region
      %106 = dma.done [#allocation4], 256
    $region29: #{tpu_custom_call.1} parent=1 // pred_fallthru
      _
    %107 = vsyncpa [#allocation3], 1
    %108 = vsyncpa [#allocation6], 1
    %109 = vsyncpa [#allocation4], 1

</llo_original>
